<compile_context>
chip_gen: v5e
topology: v5e:2x2
jax: 0.10.0
libtpu: 0.0.40
codegen_flags: <defaults>
</compile_context>

<pallas_src>
import functools

import jax
import jax.numpy as jnp
from jax.experimental import pallas as pl
from jax.experimental.pallas import tpu as pltpu


def _mha_kernel(x_ref, wqkv_ref, wp_ref, bp_ref, bias_ref, o_ref, *,
                batch, seq, num_head, head_size, compute_dtype, approx_recip):
    """Single-invocation multi-head attention.

    x_ref    : (B*T, C)       input activations, compute_dtype
    wqkv_ref : (C, 3*H*hs)    fused QKV weights (score scale folded into Q)
    wp_ref   : (H*hs, C)      output projection weight
    bp_ref   : (1, C)         output projection bias (f32)
    bias_ref : (T, T)         additive causal mask (0 = keep, -1e9 = masked), f32
    o_ref    : (B*T, C)       output (f32)
    """
    B, T, H, hs = batch, seq, num_head, head_size
    BT, Hhs = B * T, H * hs
    C = o_ref.shape[-1]

    # Fused QKV projection: one MXU matmul instead of 3*H tiny ones.
    qkv = jnp.dot(x_ref[...], wqkv_ref[...],
                  preferred_element_type=jnp.float32)          # (B*T, 3*H*hs) f32
    mask_bias = bias_ref[...]                                  # (T, T) f32

    # Bias broadcast hoisted out of the head loop; accumulate projection in f32.
    acc = jnp.broadcast_to(bp_ref[...], (BT, C)).astype(jnp.float32)

    for h in range(H):                      # static unroll: H is tiny here
        q = qkv[:, h * hs:(h + 1) * hs].reshape(B, T, hs)
        k = qkv[:, Hhs + h * hs:Hhs + (h + 1) * hs].reshape(B, T, hs)
        v = qkv[:, 2 * Hhs + h * hs:2 * Hhs + (h + 1) * hs].reshape(B, T, hs)

        # Scores; the reference's * sqrt(head_size) is already folded into Q.
        s = jnp.einsum('bqd,bkd->bqk',
                       q.astype(compute_dtype), k.astype(compute_dtype),
                       preferred_element_type=jnp.float32)     # (B, T, T) f32
        s = s + mask_bias                                      # additive causal mask

        # Explicit softmax in f32: exp and reciprocal run on the EUP.
        m = jnp.max(s, axis=-1, keepdims=True)
        e = jnp.exp(s - m)
        denom = jnp.sum(e, axis=-1, keepdims=True)
        p = e * pl.reciprocal(denom, approx=approx_recip)

        hv = jnp.einsum('bqk,bkd->bqd',
                        p.astype(compute_dtype), v.astype(compute_dtype),
                        preferred_element_type=jnp.float32)    # (B, T, hs) f32

        # Per-head output projection accumulation (replaces concatenate).
        wp_h = wp_ref[h * hs:(h + 1) * hs, :]                  # (hs, C) static slice
        acc = acc + jnp.dot(hv.reshape(BT, hs).astype(compute_dtype), wp_h,
                            preferred_element_type=jnp.float32)

    o_ref[...] = acc.astype(o_ref.dtype)


def multi_head_attention(x, wq, wk, wv, wp, bp, tril_mask, *,
                         compute_dtype=jnp.bfloat16):
    """x: (B,T,C); wq/wk/wv: (H,C,hs); wp: (H*hs,C); bp: (C,); tril_mask: (T,T)."""
    B, T, C = x.shape
    H, _, hs = wq.shape
    BT = B * T

    # Fold the reference's `* sqrt(head_size)` score scale into the Q weights.
    scale = float(hs) ** 0.5

    def pack(w):                                   # (H, C, hs) -> (C, H*hs)
        return jnp.transpose(w, (1, 0, 2)).reshape(C, H * hs)

    w_qkv = jnp.concatenate([pack(wq * scale), pack(wk), pack(wv)],
                            axis=-1).astype(compute_dtype)      # (C, 3*H*hs)
    x2d = x.reshape(BT, C).astype(compute_dtype)
    wp_c = wp.astype(compute_dtype)
    bp2 = bp.reshape(1, C).astype(jnp.float32)
    # Additive mask bias: 0 where tril==1, -1e9 where masked (finite -> NaN-safe,
    # exp underflows to exactly 0 in f32 so it matches the -inf reference).
    mask_bias = jnp.where(tril_mask == 0.0, -1e9, 0.0).astype(jnp.float32)

    approx_recip = bool(jnp.dtype(compute_dtype) != jnp.dtype(jnp.float32))
    kernel = functools.partial(
        _mha_kernel, batch=B, seq=T, num_head=H, head_size=hs,
        compute_dtype=compute_dtype, approx_recip=approx_recip)

    def full(shape):
        return pl.BlockSpec(shape, lambda i: (0,) * len(shape))

    out2d = pl.pallas_call(
        kernel,
        out_shape=jax.ShapeDtypeStruct((BT, C), jnp.float32),
        grid=(1,),                      # single step: everything fits in VMEM
        in_specs=[
            full((BT, C)),              # x (flattened over batch*seq)
            full((C, 3 * H * hs)),      # fused QKV weights
            full((H * hs, C)),          # output projection weight
            full((1, C)),               # output projection bias
            full((T, T)),               # additive causal-mask bias
        ],
        out_specs=full((BT, C)),
        compiler_params=pltpu.CompilerParams(
            dimension_semantics=("arbitrary",)),
    )(x2d, w_qkv, wp_c, bp2, mask_bias)

    return out2d.reshape(B, T, C)


def reference(x, wq, wk, wv, wp, bp, tril_mask, head_size):
    """Pure-JAX reference mirroring the PyTorch forward exactly."""
    H = wq.shape[0]
    outs = []
    for h in range(H):
        q = x @ wq[h]
        k = x @ wk[h]
        v = x @ wv[h]
        wei = (q @ jnp.swapaxes(k, -2, -1)) * (head_size ** 0.5)
        wei = jnp.where(tril_mask == 0.0, -jnp.inf, wei)
        wei = jax.nn.softmax(wei, axis=-1)
        outs.append(wei @ v)
    cat = jnp.concatenate(outs, axis=-1)
    return cat @ wp + bp


if __name__ == "__main__":
    # Small shapes consistent with the module.
    B, T = 2, 8                 # batch, sequence length
    n_embd = 32                 # embedding dim (C)
    num_head = 4
    head_size = 8               # head_size * num_head == n_embd
    block_size = 16             # causal buffer size (>= T)

    key = jax.random.PRNGKey(0)
    k_x, k_q, k_k, k_v, k_p, k_b = jax.random.split(key, 6)

    x = jax.random.normal(k_x, (B, T, n_embd), dtype=jnp.float32)

    # Deterministic parameter init (nn.Linear weights stored transposed so the
    # kernel computes x @ W directly).
    wq = jax.random.normal(k_q, (num_head, n_embd, head_size), jnp.float32) * 0.1
    wk = jax.random.normal(k_k, (num_head, n_embd, head_size), jnp.float32) * 0.1
    wv = jax.random.normal(k_v, (num_head, n_embd, head_size), jnp.float32) * 0.1
    wp = jax.random.normal(k_p, (num_head * head_size, n_embd), jnp.float32) * 0.1
    bp = jax.random.normal(k_b, (n_embd,), jnp.float32) * 0.1

    # tril buffer of shape (block_size, block_size); forward slices [:T, :T].
    tril = jnp.tril(jnp.ones((block_size, block_size), jnp.float32))
    tril_mask = tril[:T, :T]

    ref = reference(x, wq, wk, wv, wp, bp, tril_mask, head_size)

    # 1) f32 compute path: tight validation against the PyTorch-mirroring ref.
    out_f32 = jax.block_until_ready(
        multi_head_attention(x, wq, wk, wv, wp, bp, tril_mask,
                             compute_dtype=jnp.float32))
    assert out_f32.shape == (B, T, n_embd)
    assert jnp.allclose(out_f32, ref, atol=1e-5, rtol=1e-5), "f32 mismatch vs reference"

    # 2) bf16 matmul operands (performance config on v5e/v6e/v7x): same math,
    #    accumulation and softmax stay in f32; tolerance reflects bf16 rounding.
    out_bf16 = jax.block_until_ready(
        multi_head_attention(x, wq, wk, wv, wp, bp, tril_mask,
                             compute_dtype=jnp.bfloat16))
    assert out_bf16.shape == (B, T, n_embd)
    assert jnp.allclose(out_bf16, ref, atol=8e-2, rtol=8e-2), "bf16 mismatch vs reference"

    print("KERNEL_OK")
</pallas_src>

<mosaic_0001>
module attributes {stable_mosaic.version = 11 : i64} {
  func.func @_mha_kernel(%arg0: i32, %arg1: memref<16x32xf32, #tpu.memory_space<vmem>>, %arg2: memref<32x96xf32, #tpu.memory_space<vmem>>, %arg3: memref<32x32xf32, #tpu.memory_space<vmem>>, %arg4: memref<1x32xf32, #tpu.memory_space<vmem>>, %arg5: memref<8x8xf32, #tpu.memory_space<vmem>>, %arg6: memref<16x32xf32, #tpu.memory_space<vmem>>) attributes {dimension_semantics = [#tpu.dimension_semantics<arbitrary>], iteration_bounds = array<i64: 1>, scalar_prefetch = 0 : i64, scratch_operands = 0 : i64, tpu.core_type = #tpu.core_type<tc>, window_params = [{pipeline_mode = #tpu.pipeline_mode<synchronous>, transform_indices = @transform_0, window_bounds = array<i64: 16, 32>}, {pipeline_mode = #tpu.pipeline_mode<synchronous>, transform_indices = @transform_1, window_bounds = array<i64: 32, 96>}, {pipeline_mode = #tpu.pipeline_mode<synchronous>, transform_indices = @transform_2, window_bounds = array<i64: 32, 32>}, {pipeline_mode = #tpu.pipeline_mode<synchronous>, transform_indices = @transform_3, window_bounds = array<i64: 1, 32>}, {pipeline_mode = #tpu.pipeline_mode<synchronous>, transform_indices = @transform_4, window_bounds = array<i64: 8, 8>}, {pipeline_mode = #tpu.pipeline_mode<synchronous>, transform_indices = @transform_5, window_bounds = array<i64: 16, 32>}]} {
    %c0 = arith.constant 0 : index
    %c0_0 = arith.constant 0 : index
    %0 = vector.load %arg1[%c0, %c0_0] : memref<16x32xf32, #tpu.memory_space<vmem>>, vector<16x32xf32>
    %c0_1 = arith.constant 0 : index
    %c0_2 = arith.constant 0 : index
    %1 = vector.load %arg2[%c0_1, %c0_2] : memref<32x96xf32, #tpu.memory_space<vmem>>, vector<32x96xf32>
    %cst = arith.constant dense<0.000000e+00> : vector<16x96xf32>
    %2 = tpu.matmul %0, %1, %cst {dimension_numbers = #tpu.dot_dimension_numbers<[1], [0], [0], [1], [0, 0, 1, 1], [], []>} : vector<16x32xf32>, vector<32x96xf32>, vector<16x96xf32> -> vector<16x96xf32>
    %c0_3 = arith.constant 0 : index
    %c0_4 = arith.constant 0 : index
    %3 = vector.load %arg5[%c0_3, %c0_4] : memref<8x8xf32, #tpu.memory_space<vmem>>, vector<8x8xf32>
    %c0_5 = arith.constant 0 : index
    %c0_6 = arith.constant 0 : index
    %4 = vector.load %arg4[%c0_5, %c0_6] : memref<1x32xf32, #tpu.memory_space<vmem>>, vector<1x32xf32>
    %5 = vector.shape_cast %4 : vector<1x32xf32> to vector<1x32xf32>
    %6 = vector.broadcast %5 : vector<1x32xf32> to vector<16x32xf32>
    %7 = vector.extract_strided_slice %2 {offsets = [0, 0], sizes = [16, 8], strides = [1, 1]} : vector<16x96xf32> to vector<16x8xf32>
    %8 = vector.shape_cast %7 : vector<16x8xf32> to vector<2x8x8xf32>
    %9 = vector.extract_strided_slice %2 {offsets = [0, 32], sizes = [16, 8], strides = [1, 1]} : vector<16x96xf32> to vector<16x8xf32>
    %10 = vector.shape_cast %9 : vector<16x8xf32> to vector<2x8x8xf32>
    %11 = vector.extract_strided_slice %2 {offsets = [0, 64], sizes = [16, 8], strides = [1, 1]} : vector<16x96xf32> to vector<16x8xf32>
    %12 = vector.shape_cast %11 : vector<16x8xf32> to vector<2x8x8xf32>
    "tpu.trace_start"() <{level = 10 : i32, message = "bqd,bkd->bqk"}> : () -> ()
    %cst_7 = arith.constant dense<0.000000e+00> : vector<2x8x8xf32>
    %13 = tpu.matmul %8, %10, %cst_7 {dimension_numbers = #tpu.dot_dimension_numbers<[2], [2], [1], [1], [0, 0, 0, 1, 1, 1], [0], [0]>} : vector<2x8x8xf32>, vector<2x8x8xf32>, vector<2x8x8xf32> -> vector<2x8x8xf32>
    "tpu.trace_stop"() : () -> ()
    %14 = vector.shape_cast %3 : vector<8x8xf32> to vector<1x8x8xf32>
    %15 = vector.broadcast %14 : vector<1x8x8xf32> to vector<2x8x8xf32>
    %16 = arith.addf %13, %15 : vector<2x8x8xf32>
    %cst_8 = arith.constant dense<0xFF800000> : vector<2x8xf32>
    %17 = vector.multi_reduction <maximumf>, %16, %cst_8 [2] : vector<2x8x8xf32> to vector<2x8xf32>
    %18 = vector.shape_cast %17 : vector<2x8xf32> to vector<2x8x1xf32>
    %19 = vector.broadcast %18 : vector<2x8x1xf32> to vector<2x8x8xf32>
    %20 = arith.subf %16, %19 : vector<2x8x8xf32>
    %21 = math.exp %20 : vector<2x8x8xf32>
    %cst_9 = arith.constant dense<0.000000e+00> : vector<2x8xf32>
    %22 = vector.multi_reduction <add>, %21, %cst_9 [2] : vector<2x8x8xf32> to vector<2x8xf32>
    %23 = vector.shape_cast %22 : vector<2x8xf32> to vector<2x8x1xf32>
    %24 = tpu.reciprocal %23 : vector<2x8x1xf32> -> vector<2x8x1xf32>
    %25 = vector.broadcast %24 : vector<2x8x1xf32> to vector<2x8x8xf32>
    %26 = arith.mulf %21, %25 : vector<2x8x8xf32>
    "tpu.trace_start"() <{level = 10 : i32, message = "bqk,bkd->bqd"}> : () -> ()
    %cst_10 = arith.constant dense<0.000000e+00> : vector<2x8x8xf32>
    %27 = tpu.matmul %26, %12, %cst_10 {dimension_numbers = #tpu.dot_dimension_numbers<[2], [1], [1], [2], [0, 0, 0, 1, 1, 2], [0], [0]>} : vector<2x8x8xf32>, vector<2x8x8xf32>, vector<2x8x8xf32> -> vector<2x8x8xf32>
    "tpu.trace_stop"() : () -> ()
    %c0_11 = arith.constant 0 : index
    %c0_12 = arith.constant 0 : index
    %28 = vector.load %arg3[%c0_11, %c0_12] : memref<32x32xf32, #tpu.memory_space<vmem>>, vector<8x32xf32>
    %29 = vector.shape_cast %27 : vector<2x8x8xf32> to vector<16x8xf32>
    %cst_13 = arith.constant dense<0.000000e+00> : vector<16x32xf32>
    %30 = tpu.matmul %29, %28, %cst_13 {dimension_numbers = #tpu.dot_dimension_numbers<[1], [0], [0], [1], [0, 0, 1, 1], [], []>} : vector<16x8xf32>, vector<8x32xf32>, vector<16x32xf32> -> vector<16x32xf32>
    %31 = arith.addf %6, %30 : vector<16x32xf32>
    %32 = vector.extract_strided_slice %2 {offsets = [0, 8], sizes = [16, 8], strides = [1, 1]} : vector<16x96xf32> to vector<16x8xf32>
    %33 = vector.shape_cast %32 : vector<16x8xf32> to vector<2x8x8xf32>
    %34 = vector.extract_strided_slice %2 {offsets = [0, 40], sizes = [16, 8], strides = [1, 1]} : vector<16x96xf32> to vector<16x8xf32>
    %35 = vector.shape_cast %34 : vector<16x8xf32> to vector<2x8x8xf32>
    %36 = vector.extract_strided_slice %2 {offsets = [0, 72], sizes = [16, 8], strides = [1, 1]} : vector<16x96xf32> to vector<16x8xf32>
    %37 = vector.shape_cast %36 : vector<16x8xf32> to vector<2x8x8xf32>
    "tpu.trace_start"() <{level = 10 : i32, message = "bqd,bkd->bqk"}> : () -> ()
    %cst_14 = arith.constant dense<0.000000e+00> : vector<2x8x8xf32>
    %38 = tpu.matmul %33, %35, %cst_14 {dimension_numbers = #tpu.dot_dimension_numbers<[2], [2], [1], [1], [0, 0, 0, 1, 1, 1], [0], [0]>} : vector<2x8x8xf32>, vector<2x8x8xf32>, vector<2x8x8xf32> -> vector<2x8x8xf32>
    "tpu.trace_stop"() : () -> ()
    %39 = vector.shape_cast %3 : vector<8x8xf32> to vector<1x8x8xf32>
    %40 = vector.broadcast %39 : vector<1x8x8xf32> to vector<2x8x8xf32>
    %41 = arith.addf %38, %40 : vector<2x8x8xf32>
    %cst_15 = arith.constant dense<0xFF800000> : vector<2x8xf32>
    %42 = vector.multi_reduction <maximumf>, %41, %cst_15 [2] : vector<2x8x8xf32> to vector<2x8xf32>
    %43 = vector.shape_cast %42 : vector<2x8xf32> to vector<2x8x1xf32>
    %44 = vector.broadcast %43 : vector<2x8x1xf32> to vector<2x8x8xf32>
    %45 = arith.subf %41, %44 : vector<2x8x8xf32>
    %46 = math.exp %45 : vector<2x8x8xf32>
    %cst_16 = arith.constant dense<0.000000e+00> : vector<2x8xf32>
    %47 = vector.multi_reduction <add>, %46, %cst_16 [2] : vector<2x8x8xf32> to vector<2x8xf32>
    %48 = vector.shape_cast %47 : vector<2x8xf32> to vector<2x8x1xf32>
    %49 = tpu.reciprocal %48 : vector<2x8x1xf32> -> vector<2x8x1xf32>
    %50 = vector.broadcast %49 : vector<2x8x1xf32> to vector<2x8x8xf32>
    %51 = arith.mulf %46, %50 : vector<2x8x8xf32>
    "tpu.trace_start"() <{level = 10 : i32, message = "bqk,bkd->bqd"}> : () -> ()
    %cst_17 = arith.constant dense<0.000000e+00> : vector<2x8x8xf32>
    %52 = tpu.matmul %51, %37, %cst_17 {dimension_numbers = #tpu.dot_dimension_numbers<[2], [1], [1], [2], [0, 0, 0, 1, 1, 2], [0], [0]>} : vector<2x8x8xf32>, vector<2x8x8xf32>, vector<2x8x8xf32> -> vector<2x8x8xf32>
    "tpu.trace_stop"() : () -> ()
    %c8 = arith.constant 8 : index
    %c0_18 = arith.constant 0 : index
    %53 = vector.load %arg3[%c8, %c0_18] : memref<32x32xf32, #tpu.memory_space<vmem>>, vector<8x32xf32>
    %54 = vector.shape_cast %52 : vector<2x8x8xf32> to vector<16x8xf32>
    %cst_19 = arith.constant dense<0.000000e+00> : vector<16x32xf32>
    %55 = tpu.matmul %54, %53, %cst_19 {dimension_numbers = #tpu.dot_dimension_numbers<[1], [0], [0], [1], [0, 0, 1, 1], [], []>} : vector<16x8xf32>, vector<8x32xf32>, vector<16x32xf32> -> vector<16x32xf32>
    %56 = arith.addf %31, %55 : vector<16x32xf32>
    %57 = vector.extract_strided_slice %2 {offsets = [0, 16], sizes = [16, 8], strides = [1, 1]} : vector<16x96xf32> to vector<16x8xf32>
    %58 = vector.shape_cast %57 : vector<16x8xf32> to vector<2x8x8xf32>
    %59 = vector.extract_strided_slice %2 {offsets = [0, 48], sizes = [16, 8], strides = [1, 1]} : vector<16x96xf32> to vector<16x8xf32>
    %60 = vector.shape_cast %59 : vector<16x8xf32> to vector<2x8x8xf32>
    %61 = vector.extract_strided_slice %2 {offsets = [0, 80], sizes = [16, 8], strides = [1, 1]} : vector<16x96xf32> to vector<16x8xf32>
    %62 = vector.shape_cast %61 : vector<16x8xf32> to vector<2x8x8xf32>
    "tpu.trace_start"() <{level = 10 : i32, message = "bqd,bkd->bqk"}> : () -> ()
    %cst_20 = arith.constant dense<0.000000e+00> : vector<2x8x8xf32>
    %63 = tpu.matmul %58, %60, %cst_20 {dimension_numbers = #tpu.dot_dimension_numbers<[2], [2], [1], [1], [0, 0, 0, 1, 1, 1], [0], [0]>} : vector<2x8x8xf32>, vector<2x8x8xf32>, vector<2x8x8xf32> -> vector<2x8x8xf32>
    "tpu.trace_stop"() : () -> ()
    %64 = vector.shape_cast %3 : vector<8x8xf32> to vector<1x8x8xf32>
    %65 = vector.broadcast %64 : vector<1x8x8xf32> to vector<2x8x8xf32>
    %66 = arith.addf %63, %65 : vector<2x8x8xf32>
    %cst_21 = arith.constant dense<0xFF800000> : vector<2x8xf32>
    %67 = vector.multi_reduction <maximumf>, %66, %cst_21 [2] : vector<2x8x8xf32> to vector<2x8xf32>
    %68 = vector.shape_cast %67 : vector<2x8xf32> to vector<2x8x1xf32>
    %69 = vector.broadcast %68 : vector<2x8x1xf32> to vector<2x8x8xf32>
    %70 = arith.subf %66, %69 : vector<2x8x8xf32>
    %71 = math.exp %70 : vector<2x8x8xf32>
    %cst_22 = arith.constant dense<0.000000e+00> : vector<2x8xf32>
    %72 = vector.multi_reduction <add>, %71, %cst_22 [2] : vector<2x8x8xf32> to vector<2x8xf32>
    %73 = vector.shape_cast %72 : vector<2x8xf32> to vector<2x8x1xf32>
    %74 = tpu.reciprocal %73 : vector<2x8x1xf32> -> vector<2x8x1xf32>
    %75 = vector.broadcast %74 : vector<2x8x1xf32> to vector<2x8x8xf32>
    %76 = arith.mulf %71, %75 : vector<2x8x8xf32>
    "tpu.trace_start"() <{level = 10 : i32, message = "bqk,bkd->bqd"}> : () -> ()
    %cst_23 = arith.constant dense<0.000000e+00> : vector<2x8x8xf32>
    %77 = tpu.matmul %76, %62, %cst_23 {dimension_numbers = #tpu.dot_dimension_numbers<[2], [1], [1], [2], [0, 0, 0, 1, 1, 2], [0], [0]>} : vector<2x8x8xf32>, vector<2x8x8xf32>, vector<2x8x8xf32> -> vector<2x8x8xf32>
    "tpu.trace_stop"() : () -> ()
    %c16 = arith.constant 16 : index
    %c0_24 = arith.constant 0 : index
    %78 = vector.load %arg3[%c16, %c0_24] : memref<32x32xf32, #tpu.memory_space<vmem>>, vector<8x32xf32>
    %79 = vector.shape_cast %77 : vector<2x8x8xf32> to vector<16x8xf32>
    %cst_25 = arith.constant dense<0.000000e+00> : vector<16x32xf32>
    %80 = tpu.matmul %79, %78, %cst_25 {dimension_numbers = #tpu.dot_dimension_numbers<[1], [0], [0], [1], [0, 0, 1, 1], [], []>} : vector<16x8xf32>, vector<8x32xf32>, vector<16x32xf32> -> vector<16x32xf32>
    %81 = arith.addf %56, %80 : vector<16x32xf32>
    %82 = vector.extract_strided_slice %2 {offsets = [0, 24], sizes = [16, 8], strides = [1, 1]} : vector<16x96xf32> to vector<16x8xf32>
    %83 = vector.shape_cast %82 : vector<16x8xf32> to vector<2x8x8xf32>
    %84 = vector.extract_strided_slice %2 {offsets = [0, 56], sizes = [16, 8], strides = [1, 1]} : vector<16x96xf32> to vector<16x8xf32>
    %85 = vector.shape_cast %84 : vector<16x8xf32> to vector<2x8x8xf32>
    %86 = vector.extract_strided_slice %2 {offsets = [0, 88], sizes = [16, 8], strides = [1, 1]} : vector<16x96xf32> to vector<16x8xf32>
    %87 = vector.shape_cast %86 : vector<16x8xf32> to vector<2x8x8xf32>
    "tpu.trace_start"() <{level = 10 : i32, message = "bqd,bkd->bqk"}> : () -> ()
    %cst_26 = arith.constant dense<0.000000e+00> : vector<2x8x8xf32>
    %88 = tpu.matmul %83, %85, %cst_26 {dimension_numbers = #tpu.dot_dimension_numbers<[2], [2], [1], [1], [0, 0, 0, 1, 1, 1], [0], [0]>} : vector<2x8x8xf32>, vector<2x8x8xf32>, vector<2x8x8xf32> -> vector<2x8x8xf32>
    "tpu.trace_stop"() : () -> ()
    %89 = vector.shape_cast %3 : vector<8x8xf32> to vector<1x8x8xf32>
    %90 = vector.broadcast %89 : vector<1x8x8xf32> to vector<2x8x8xf32>
    %91 = arith.addf %88, %90 : vector<2x8x8xf32>
    %cst_27 = arith.constant dense<0xFF800000> : vector<2x8xf32>
    %92 = vector.multi_reduction <maximumf>, %91, %cst_27 [2] : vector<2x8x8xf32> to vector<2x8xf32>
    %93 = vector.shape_cast %92 : vector<2x8xf32> to vector<2x8x1xf32>
    %94 = vector.broadcast %93 : vector<2x8x1xf32> to vector<2x8x8xf32>
    %95 = arith.subf %91, %94 : vector<2x8x8xf32>
    %96 = math.exp %95 : vector<2x8x8xf32>
    %cst_28 = arith.constant dense<0.000000e+00> : vector<2x8xf32>
    %97 = vector.multi_reduction <add>, %96, %cst_28 [2] : vector<2x8x8xf32> to vector<2x8xf32>
    %98 = vector.shape_cast %97 : vector<2x8xf32> to vector<2x8x1xf32>
    %99 = tpu.reciprocal %98 : vector<2x8x1xf32> -> vector<2x8x1xf32>
    %100 = vector.broadcast %99 : vector<2x8x1xf32> to vector<2x8x8xf32>
    %101 = arith.mulf %96, %100 : vector<2x8x8xf32>
    "tpu.trace_start"() <{level = 10 : i32, message = "bqk,bkd->bqd"}> : () -> ()
    %cst_29 = arith.constant dense<0.000000e+00> : vector<2x8x8xf32>
    %102 = tpu.matmul %101, %87, %cst_29 {dimension_numbers = #tpu.dot_dimension_numbers<[2], [1], [1], [2], [0, 0, 0, 1, 1, 2], [0], [0]>} : vector<2x8x8xf32>, vector<2x8x8xf32>, vector<2x8x8xf32> -> vector<2x8x8xf32>
    "tpu.trace_stop"() : () -> ()
    %c24 = arith.constant 24 : index
    %c0_30 = arith.constant 0 : index
    %103 = vector.load %arg3[%c24, %c0_30] : memref<32x32xf32, #tpu.memory_space<vmem>>, vector<8x32xf32>
    %104 = vector.shape_cast %102 : vector<2x8x8xf32> to vector<16x8xf32>
    %cst_31 = arith.constant dense<0.000000e+00> : vector<16x32xf32>
    %105 = tpu.matmul %104, %103, %cst_31 {dimension_numbers = #tpu.dot_dimension_numbers<[1], [0], [0], [1], [0, 0, 1, 1], [], []>} : vector<16x8xf32>, vector<8x32xf32>, vector<16x32xf32> -> vector<16x32xf32>
    %106 = arith.addf %81, %105 : vector<16x32xf32>
    %c0_32 = arith.constant 0 : index
    %c0_33 = arith.constant 0 : index
    %107 = vector.load %arg6[%c0_32, %c0_33] : memref<16x32xf32, #tpu.memory_space<vmem>>, vector<16x32xf32>
    tpu.vector_store %arg6[%c0_32, %c0_33], %106 {strides = array<i32>} : memref<16x32xf32, #tpu.memory_space<vmem>>, vector<16x32xf32>,
    return
  }
  func.func @transform_0(%arg0: i32) -> (i32, i32) {
    %c0_i32 = arith.constant 0 : i32
    %c0_i32_0 = arith.constant 0 : i32
    %c0_i32_1 = arith.constant 0 : i32
    return %c0_i32, %c0_i32_0 : i32, i32
  }
  func.func @transform_1(%arg0: i32) -> (i32, i32) {
    %c0_i32 = arith.constant 0 : i32
    %c0_i32_0 = arith.constant 0 : i32
    %c0_i32_1 = arith.constant 0 : i32
    return %c0_i32, %c0_i32_0 : i32, i32
  }
  func.func @transform_2(%arg0: i32) -> (i32, i32) {
    %c0_i32 = arith.constant 0 : i32
    %c0_i32_0 = arith.constant 0 : i32
    %c0_i32_1 = arith.constant 0 : i32
    return %c0_i32, %c0_i32_0 : i32, i32
  }
  func.func @transform_3(%arg0: i32) -> (i32, i32) {
    %c0_i32 = arith.constant 0 : i32
    %c0_i32_0 = arith.constant 0 : i32
    %c0_i32_1 = arith.constant 0 : i32
    return %c0_i32, %c0_i32_0 : i32, i32
  }
  func.func @transform_4(%arg0: i32) -> (i32, i32) {
    %c0_i32 = arith.constant 0 : i32
    %c0_i32_0 = arith.constant 0 : i32
    %c0_i32_1 = arith.constant 0 : i32
    return %c0_i32, %c0_i32_0 : i32, i32
  }
  func.func @transform_5(%arg0: i32) -> (i32, i32) {
    %c0_i32 = arith.constant 0 : i32
    %c0_i32_0 = arith.constant 0 : i32
    %c0_i32_1 = arith.constant 0 : i32
    return %c0_i32, %c0_i32_0 : i32, i32
  }
}

</mosaic_0001>

<llo_original>
// kernel: tpu_custom_call.1
$region0: #{tpu_custom_call.1}
  #allocation0 [shape = 'u32[]', space=smem, size = 0x4, offset = 0x4, fixed_abs, tag = 'smem constant byte address 0x4 - core index']
  #allocation1 [shape = 'u32[72,128]{1,0:T(1,128)}', space=vmem, size = 0x9000, scoped, tag = 'internal scratch']
  %s0 = inlined_call_operand.hbm [shape: f32[16,32], index: 0, kind: input, shape index: {}]
  %s1 = inlined_call_operand.hbm [shape: f32[32,96], index: 1, kind: input, shape index: {}]
  %s2 = inlined_call_operand.hbm [shape: f32[32,32], index: 2, kind: input, shape index: {}]
  %s3 = inlined_call_operand.vmem [shape: f32[1,32], index: 3, kind: input, shape index: {}]
  %s4 = inlined_call_operand.hbm [shape: f32[8,8], index: 4, kind: input, shape index: {}]
  %s5 = inlined_call_operand.hbm [shape: f32[16,32], index: 5, kind: output, shape index: {}]
  %s6 = sld [smem:[#allocation0]]
  $region46: #{tpu_custom_call.1} parent=0
    _
  %s8 = ssub.s32 1, %s6
  %s9 = scalar_select 0, %s8, %s6
  $region1: #{tpu_custom_call.1} parent=0
    #allocation2 [shape = 'u8[8192]{0}', space=vmem, size = 0x2000, scoped, tag = 'input window, operand 0, single buffered']
    #allocation3 [shape = 's32[1]{0}', space=sflag, size = 0x4, scoped, tag = 'scoped memory for tpu_custom_call.1']
    #allocation4 [shape = 's32[1]{0}', space=sflag, size = 0x4, scoped, tag = 'scoped memory for tpu_custom_call.1']
    #allocation5 [shape = 'u8[16384]{0}', space=vmem, size = 0x4000, scoped, tag = 'input window, operand 1, single buffered']
    #allocation6 [shape = 's32[1]{0}', space=sflag, size = 0x4, scoped, tag = 'scoped memory for tpu_custom_call.1']
    #allocation7 [shape = 'u8[16384]{0}', space=vmem, size = 0x4000, scoped, tag = 'input window, operand 2, single buffered']
    #allocation8 [shape = 'u8[4096]{0}', space=vmem, size = 0x1000, scoped, tag = 'input window, operand 4, single buffered']
    #allocation9 [shape = 's32[1]{0}', space=sflag, size = 0x4, scoped, tag = 'scoped memory for tpu_custom_call.1']
    #allocation10 [shape = 'u8[8192]{0}', space=vmem, size = 0x2000, scoped, tag = 'output window, operand 0, single buffered']
    %10 = vsyncpa [#allocation3], 0
    %11 = vsyncpa [#allocation6], 0
    %12 = vsyncpa [#allocation9], 0
    %13 = vsyncpa [#allocation4], 0
    // Predicated region
    $region2: #{tpu_custom_call.1} parent=1 // pred_check
      _
    $region3: #{tpu_custom_call.1} parent=1 // pred_check_branch
      %15 = sbr.rel (0) target = $region5
    $region4: #{tpu_custom_call.1} parent=1 // pred_region
      %17 = vsyncadd [#allocation3], 0
      %s18 = sshll.u32 %s0, 4
      %s19 = int_to_ptr.hbm [resolvable:$true] %s18
      %s20 = sshll.u32 [#allocation2], 4
      %s21 = int_to_ptr.vmem [resolvable:$true] %s20
      %26 = dma.hbm_to_vmem [thread:$0]  %s19, 256, %s21, [#allocation3], 128, 128, 8
    $region5: #{tpu_custom_call.1} parent=1 // pred_fallthru
      _
    // Predicated region
    $region6: #{tpu_custom_call.1} parent=1 // pred_check
      _
    $region7: #{tpu_custom_call.1} parent=1 // pred_check_branch
      %28 = sbr.rel (0) target = $region9
    $region8: #{tpu_custom_call.1} parent=1 // pred_region
      %30 = vsyncadd [#allocation6], 0
      %s31 = sshll.u32 %s1, 4
      %s32 = int_to_ptr.hbm [resolvable:$true] %s31
      %s33 = sshll.u32 [#allocation5], 4
      %s34 = int_to_ptr.vmem [resolvable:$true] %s33
      %39 = dma.hbm_to_vmem [thread:$0]  %s32, 512, %s34, [#allocation6], 128, 128, 8
    $region9: #{tpu_custom_call.1} parent=1 // pred_fallthru
      _
    // Predicated region
    $region10: #{tpu_custom_call.1} parent=1 // pred_check
      _
    $region11: #{tpu_custom_call.1} parent=1 // pred_check_branch
      %41 = sbr.rel (0) target = $region13
    $region12: #{tpu_custom_call.1} parent=1 // pred_region
      %43 = vsyncadd [#allocation6], 0
      %s44 = sshll.u32 %s2, 4
      %s45 = int_to_ptr.hbm [resolvable:$true] %s44
      %s46 = sshll.u32 [#allocation7], 4
      %s47 = int_to_ptr.vmem [resolvable:$true] %s46
      %52 = dma.hbm_to_vmem [thread:$0]  %s45, 512, %s47, [#allocation6], 128, 128, 8
    $region13: #{tpu_custom_call.1} parent=1 // pred_fallthru
      _
    // Predicated region
    $region14: #{tpu_custom_call.1} parent=1 // pred_check
      _
    $region15: #{tpu_custom_call.1} parent=1 // pred_check_branch
      %54 = sbr.rel (0) target = $region17
    $region16: #{tpu_custom_call.1} parent=1 // pred_region
      _
    $region17: #{tpu_custom_call.1} parent=1 // pred_fallthru
      _
    // Predicated region
    $region18: #{tpu_custom_call.1} parent=1 // pred_check
      _
    $region19: #{tpu_custom_call.1} parent=1 // pred_check_branch
      %56 = sbr.rel (0) target = $region21
    $region20: #{tpu_custom_call.1} parent=1 // pred_region
      %58 = vsyncadd [#allocation9], 0
      %s60 = sshll.u32 %s4, 4
      %s61 = int_to_ptr.hbm [resolvable:$true] %s60
      %s62 = sshll.u32 [#allocation8], 4
      %s63 = int_to_ptr.vmem [resolvable:$true] %s62
      %65 = dma.hbm_to_vmem [thread:$0]  %s61, 128, %s63, [#allocation9]
    $region21: #{tpu_custom_call.1} parent=1 // pred_fallthru
      _
    // Predicated region
    $region22: #{tpu_custom_call.1} parent=1 // pred_check
      _
    $region23: #{tpu_custom_call.1} parent=1 // pred_check_branch
      %67 = sbr.rel (0) target = $region25
    $region24: #{tpu_custom_call.1} parent=1 // pred_region
      %69 = dma.done [#allocation3], 256
    $region25: #{tpu_custom_call.1} parent=1 // pred_fallthru
      _
    // Predicated region
    $region26: #{tpu_custom_call.1} parent=1 // pred_check
      _
    $region27: #{tpu_custom_call.1} parent=1 // pred_check_branch
      %71 = sbr.rel (0) target = $region29
    $region28: #{tpu_custom_call.1} parent=1 // pred_region
      %73 = dma.done [#allocation6], 512
    $region29: #{tpu_custom_call.1} parent=1 // pred_fallthru
      _
    // Predicated region
    $region30: #{tpu_custom_call.1} parent=1 // pred_check
      _
    $region31: #{tpu_custom_call.1} parent=1 // pred_check_branch
      %75 = sbr.rel (0) target = $region33
    $region32: #{tpu_custom_call.1} parent=1 // pred_region
      %77 = dma.done [#allocation6], 512
    $region33: #{tpu_custom_call.1} parent=1 // pred_fallthru
      _
    // Predicated region
    $region34: #{tpu_custom_call.1} parent=1 // pred_check
      _
    $region35: #{tpu_custom_call.1} parent=1 // pred_check_branch
      %79 = sbr.rel (0) target = $region37
    $region36: #{tpu_custom_call.1} parent=1 // pred_region
      %81 = dma.done [#allocation9], 128
    $region37: #{tpu_custom_call.1} parent=1 // pred_fallthru
      _
    %v82 = vld [vmem:[#allocation2] sm:$0xff]
    %v83 = vld [vmem:[#allocation2 + $0x8] sm:$0xff]
    %v84 = vld [vmem:[#allocation5] sm:$0xff]
    %v85 = vld [vmem:[#allocation5 + $0x8] sm:$0xff]
    %v86 = vld [vmem:[#allocation5 + $0x10] sm:$0xff]
    %v87 = vld [vmem:[#allocation5 + $0x18] sm:$0xff]
    %vm88 = vcmask 261120
    %v90 = vsel %vm88, %v82, 0
    %v93 = vsel %vm88, %v83, 0
    %95 = vmatpush.msra.mxu0 0.0
    %96 = vmatpush.msra.mxu0 0.0
    %97 = vmatpush.msra.mxu0 0.0
    %98 = vmatpush.msra.mxu0 0.0
    %99 = vmatpush.msra.mxu0 0.0
    %100 = vmatpush.msra.mxu0 0.0
    %101 = vmatpush.msra.mxu0 0.0
    %102 = vmatpush.msra.mxu0 0.0
    %103 = vmatpush.msra.mxu0 0.0
    %104 = vmatpush.msra.mxu0 0.0
    %105 = vmatpush.msra.mxu0 0.0
    %106 = vmatpush.msra.mxu0 0.0
    %107 = vmatpush.msra.mxu0 %v87
    %108 = vmatpush.msra.mxu0 %v86
    %109 = vmatpush.msra.mxu0 %v85
    %110 = vmatpush.msra.mxu0 %v84
    %111 = vmatmul.f32.gmra.mxu0 %v90
    %v112 = vpop.f32.mrf.mxu0
    %v113 = vadd.f32 0.0, %v112
    %114 = vmatmul.f32.gmra.mxu0 %v93
    %v115 = vpop.f32.mrf.mxu0
    %v116 = vadd.f32 0.0, %v115
    %117 = vdwg.mxu0
    %v118 = vld [vmem:[#allocation8] sm:$0xff]
    %v119 = vld [vmem:[%s3] sm:$0x1]
    %v121 = vperm.slane %v119, 0
    %124 = vrot.lane.b32.xlu0 %v113, 96
    %v125 = vpop.permute.xlu0 %124
    %vm126 = vcmask 64512
    %v127 = vsel %vm126, %v113, 0
    %v129 = vsel %vm126, %v125, 0
    %131 = vmatpush.xpose.msra.mxu0 0.0
    %132 = vmatpush.xpose.msra.mxu0 0.0
    %133 = vmatpush.xpose.msra.mxu0 0.0
    %134 = vmatpush.xpose.msra.mxu0 0.0
    %135 = vmatpush.xpose.msra.mxu0 0.0
    %136 = vmatpush.xpose.msra.mxu0 0.0
    %137 = vmatpush.xpose.msra.mxu0 0.0
    %138 = vmatpush.xpose.msra.mxu0 0.0
    %139 = vmatpush.xpose.msra.mxu0 0.0
    %140 = vmatpush.xpose.msra.mxu0 0.0
    %141 = vmatpush.xpose.msra.mxu0 0.0
    %142 = vmatpush.xpose.msra.mxu0 0.0
    %143 = vmatpush.xpose.msra.mxu0 0.0
    %144 = vmatpush.xpose.msra.mxu0 0.0
    %145 = vmatpush.xpose.msra.mxu0 0.0
    %146 = vmatpush.xpose.msra.mxu0 %v129
    %147 = vmatmul.f32.gmra.mxu0 %v127
    %v148 = vpop.f32.mrf.mxu0
    %v149 = vadd.f32 %v118, %v148
    %150 = vdwg.mxu0
    %152 = vrot.lane.b32.xlu0 %v116, 96
    %v153 = vpop.permute.xlu0 %152
    %v154 = vsel %vm126, %v116, 0
    %v156 = vsel %vm126, %v153, 0
    %158 = vmatpush.xpose.msra.mxu0 0.0
    %159 = vmatpush.xpose.msra.mxu0 0.0
    %160 = vmatpush.xpose.msra.mxu0 0.0
    %161 = vmatpush.xpose.msra.mxu0 0.0
    %162 = vmatpush.xpose.msra.mxu0 0.0
    %163 = vmatpush.xpose.msra.mxu0 0.0
    %164 = vmatpush.xpose.msra.mxu0 0.0
    %165 = vmatpush.xpose.msra.mxu0 0.0
    %166 = vmatpush.xpose.msra.mxu0 0.0
    %167 = vmatpush.xpose.msra.mxu0 0.0
    %168 = vmatpush.xpose.msra.mxu0 0.0
    %169 = vmatpush.xpose.msra.mxu0 0.0
    %170 = vmatpush.xpose.msra.mxu0 0.0
    %171 = vmatpush.xpose.msra.mxu0 0.0
    %172 = vmatpush.xpose.msra.mxu0 0.0
    %173 = vmatpush.xpose.msra.mxu0 %v156
    %174 = vmatmul.f32.gmra.mxu0 %v154
    %v175 = vpop.f32.mrf.mxu0
    %v176 = vadd.f32 %v118, %v175
    %177 = vdwg.mxu0
    %v178 = vsel %vm126, %v149, -inf
    %179 = vmax.xlane.f32.xlu0 %v178
    %v180 = vpop.xlane.xlu0 %179
    %v181 = vsel %vm126, %v176, -inf
    %182 = vmax.xlane.f32.xlu0 %v181
    %v183 = vpop.xlane.xlu0 %182
    %v184 = vsub.f32 %v149, %v180
    %v185 = vsub.f32 %v176, %v183
    %v186 = vmul.f32 %v184, 1.442695
    %v187 = vpow.pop %v186
    %v188 = vmul.f32 %v185, 1.442695
    %v189 = vpow.pop %v188
    %v190 = vsel %vm126, %v187, 0.0
    %191 = vadd.xlane.f32.xlu0 %v190
    %v192 = vpop.xlane.xlu0 %191
    %v193 = vsel %vm126, %v189, 0.0
    %194 = vadd.xlane.f32.xlu0 %v193
    %v195 = vpop.xlane.xlu0 %194
    %v196 = vrcp.pop %v192
    %v197 = vmul.f32 %v192, %v196
    %v198 = vsub.f32 1.0, %v197
    %v199 = vmul.f32 %v196, %v198
    %v200 = vadd.f32 %v196, %v199
    %vm201 = vweird.f32 %v192
    %vm202 = vweird.f32 %v196
    %vm203 = vmor %vm201, %vm202
    %v204 = vsel %vm203, %v196, %v200
    %v205 = vand.u32 2147483647, %v192
    %vm206 = vcmp.eq.f32.partialorder %v205, 8.507059e+37
    %v207 = vand.u32 %v192, 2147483648
    %v208 = vor.u32 1.1754944e-38, %v207
    %v209 = vsel %vm206, %v208, %v204
    %v210 = vrcp.pop %v195
    %v211 = vmul.f32 %v195, %v210
    %v212 = vsub.f32 1.0, %v211
    %v213 = vmul.f32 %v210, %v212
    %v214 = vadd.f32 %v210, %v213
    %vm215 = vweird.f32 %v195
    %vm216 = vweird.f32 %v210
    %vm217 = vmor %vm215, %vm216
    %v218 = vsel %vm217, %v210, %v214
    %v219 = vand.u32 2147483647, %v195
    %vm220 = vcmp.eq.f32.partialorder %v219, 8.507059e+37
    %v221 = vand.u32 %v195, 2147483648
    %v222 = vor.u32 1.1754944e-38, %v221
    %v223 = vsel %vm220, %v222, %v218
    %v224 = vmul.f32 %v187, %v209
    %v225 = vmul.f32 %v189, %v223
    %226 = vrot.lane.b32.xlu0 %v113, 64
    %v227 = vpop.permute.xlu0 %226
    %v230 = vsel %vm126, %v224, 0
    %232 = vmatpush.msra.mxu0 0.0
    %233 = vmatpush.msra.mxu0 0.0
    %234 = vmatpush.msra.mxu0 0.0
    %235 = vmatpush.msra.mxu0 0.0
    %236 = vmatpush.msra.mxu0 0.0
    %237 = vmatpush.msra.mxu0 0.0
    %238 = vmatpush.msra.mxu0 0.0
    %239 = vmatpush.msra.mxu0 0.0
    %240 = vmatpush.msra.mxu0 0.0
    %241 = vmatpush.msra.mxu0 0.0
    %242 = vmatpush.msra.mxu0 0.0
    %243 = vmatpush.msra.mxu0 0.0
    %244 = vmatpush.msra.mxu0 0.0
    %245 = vmatpush.msra.mxu0 0.0
    %246 = vmatpush.msra.mxu0 0.0
    %247 = vmatpush.msra.mxu0 %v227
    %248 = vmatmul.f32.gmra.mxu0 %v230
    %v249 = vpop.f32.mrf.mxu0
    %v250 = vadd.f32 0.0, %v249
    %251 = vdwg.mxu0
    %252 = vrot.lane.b32.xlu0 %v116, 64
    %v253 = vpop.permute.xlu0 %252
    %v256 = vsel %vm126, %v225, 0
    %258 = vmatpush.msra.mxu0 0.0
    %259 = vmatpush.msra.mxu0 0.0
    %260 = vmatpush.msra.mxu0 0.0
    %261 = vmatpush.msra.mxu0 0.0
    %262 = vmatpush.msra.mxu0 0.0
    %263 = vmatpush.msra.mxu0 0.0
    %264 = vmatpush.msra.mxu0 0.0
    %265 = vmatpush.msra.mxu0 0.0
    %266 = vmatpush.msra.mxu0 0.0
    %267 = vmatpush.msra.mxu0 0.0
    %268 = vmatpush.msra.mxu0 0.0
    %269 = vmatpush.msra.mxu0 0.0
    %270 = vmatpush.msra.mxu0 0.0
    %271 = vmatpush.msra.mxu0 0.0
    %272 = vmatpush.msra.mxu0 0.0
    %273 = vmatpush.msra.mxu0 %v253
    %274 = vmatmul.f32.gmra.mxu0 %v256
    %v275 = vpop.f32.mrf.mxu0
    %v276 = vadd.f32 0.0, %v275
    %277 = vdwg.mxu0
    %v278 = vld [vmem:[#allocation7] sm:$0xff]
    %v280 = vsel %vm126, %v250, 0
    %v283 = vsel %vm126, %v276, 0
    %285 = vmatpush.msra.mxu0 0.0
    %286 = vmatpush.msra.mxu0 0.0
    %287 = vmatpush.msra.mxu0 0.0
    %288 = vmatpush.msra.mxu0 0.0
    %289 = vmatpush.msra.mxu0 0.0
    %290 = vmatpush.msra.mxu0 0.0
    %291 = vmatpush.msra.mxu0 0.0
    %292 = vmatpush.msra.mxu0 0.0
    %293 = vmatpush.msra.mxu0 0.0
    %294 = vmatpush.msra.mxu0 0.0
    %295 = vmatpush.msra.mxu0 0.0
    %296 = vmatpush.msra.mxu0 0.0
    %297 = vmatpush.msra.mxu0 0.0
    %298 = vmatpush.msra.mxu0 0.0
    %299 = vmatpush.msra.mxu0 0.0
    %300 = vmatpush.msra.mxu0 %v278
    %301 = vmatmul.f32.gmra.mxu0 %v280
    %v302 = vpop.f32.mrf.mxu0
    %v303 = vadd.f32 0.0, %v302
    %304 = vmatmul.f32.gmra.mxu0 %v283
    %v305 = vpop.f32.mrf.mxu0
    %v306 = vadd.f32 0.0, %v305
    %307 = vdwg.mxu0
    %v308 = vadd.f32 %v121, %v303
    %v309 = vadd.f32 %v121, %v306
    %310 = vrot.lane.b32.xlu0 %v113, 120
    %v311 = vpop.permute.xlu0 %310
    %312 = vrot.lane.b32.xlu0 %v113, 88
    %v313 = vpop.permute.xlu0 %312
    %v314 = vsel %vm126, %v311, 0
    %v316 = vsel %vm126, %v313, 0
    %318 = vmatpush.xpose.msra.mxu0 0.0
    %319 = vmatpush.xpose.msra.mxu0 0.0
    %320 = vmatpush.xpose.msra.mxu0 0.0
    %321 = vmatpush.xpose.msra.mxu0 0.0
    %322 = vmatpush.xpose.msra.mxu0 0.0
    %323 = vmatpush.xpose.msra.mxu0 0.0
    %324 = vmatpush.xpose.msra.mxu0 0.0
    %325 = vmatpush.xpose.msra.mxu0 0.0
    %326 = vmatpush.xpose.msra.mxu0 0.0
    %327 = vmatpush.xpose.msra.mxu0 0.0
    %328 = vmatpush.xpose.msra.mxu0 0.0
    %329 = vmatpush.xpose.msra.mxu0 0.0
    %330 = vmatpush.xpose.msra.mxu0 0.0
    %331 = vmatpush.xpose.msra.mxu0 0.0
    %332 = vmatpush.xpose.msra.mxu0 0.0
    %333 = vmatpush.xpose.msra.mxu0 %v316
    %334 = vmatmul.f32.gmra.mxu0 %v314
    %v335 = vpop.f32.mrf.mxu0
    %v336 = vadd.f32 %v118, %v335
    %337 = vdwg.mxu0
    %338 = vrot.lane.b32.xlu0 %v116, 120
    %v339 = vpop.permute.xlu0 %338
    %340 = vrot.lane.b32.xlu0 %v116, 88
    %v341 = vpop.permute.xlu0 %340
    %v342 = vsel %vm126, %v339, 0
    %v344 = vsel %vm126, %v341, 0
    %346 = vmatpush.xpose.msra.mxu0 0.0
    %347 = vmatpush.xpose.msra.mxu0 0.0
    %348 = vmatpush.xpose.msra.mxu0 0.0
    %349 = vmatpush.xpose.msra.mxu0 0.0
    %350 = vmatpush.xpose.msra.mxu0 0.0
    %351 = vmatpush.xpose.msra.mxu0 0.0
    %352 = vmatpush.xpose.msra.mxu0 0.0
    %353 = vmatpush.xpose.msra.mxu0 0.0
    %354 = vmatpush.xpose.msra.mxu0 0.0
    %355 = vmatpush.xpose.msra.mxu0 0.0
    %356 = vmatpush.xpose.msra.mxu0 0.0
    %357 = vmatpush.xpose.msra.mxu0 0.0
    %358 = vmatpush.xpose.msra.mxu0 0.0
    %359 = vmatpush.xpose.msra.mxu0 0.0
    %360 = vmatpush.xpose.msra.mxu0 0.0
    %361 = vmatpush.xpose.msra.mxu0 %v344
    %362 = vmatmul.f32.gmra.mxu0 %v342
    %v363 = vpop.f32.mrf.mxu0
    %v364 = vadd.f32 %v118, %v363
    %365 = vdwg.mxu0
    %v366 = vsel %vm126, %v336, -inf
    %367 = vmax.xlane.f32.xlu0 %v366
    %v368 = vpop.xlane.xlu0 %367
    %v369 = vsel %vm126, %v364, -inf
    %370 = vmax.xlane.f32.xlu0 %v369
    %v371 = vpop.xlane.xlu0 %370
    %v372 = vsub.f32 %v336, %v368
    %v373 = vsub.f32 %v364, %v371
    %v374 = vmul.f32 %v372, 1.442695
    %v375 = vpow.pop %v374
    %v376 = vmul.f32 %v373, 1.442695
    %v377 = vpow.pop %v376
    %v378 = vsel %vm126, %v375, 0.0
    %379 = vadd.xlane.f32.xlu0 %v378
    %v380 = vpop.xlane.xlu0 %379
    %v381 = vsel %vm126, %v377, 0.0
    %382 = vadd.xlane.f32.xlu0 %v381
    %v383 = vpop.xlane.xlu0 %382
    %v384 = vrcp.pop %v380
    %v385 = vmul.f32 %v380, %v384
    %v386 = vsub.f32 1.0, %v385
    %v387 = vmul.f32 %v384, %v386
    %v388 = vadd.f32 %v384, %v387
    %vm389 = vweird.f32 %v380
    %vm390 = vweird.f32 %v384
    %vm391 = vmor %vm389, %vm390
    %v392 = vsel %vm391, %v384, %v388
    %v393 = vand.u32 2147483647, %v380
    %vm394 = vcmp.eq.f32.partialorder %v393, 8.507059e+37
    %v395 = vand.u32 %v380, 2147483648
    %v396 = vor.u32 1.1754944e-38, %v395
    %v397 = vsel %vm394, %v396, %v392
    %v398 = vrcp.pop %v383
    %v399 = vmul.f32 %v383, %v398
    %v400 = vsub.f32 1.0, %v399
    %v401 = vmul.f32 %v398, %v400
    %v402 = vadd.f32 %v398, %v401
    %vm403 = vweird.f32 %v383
    %vm404 = vweird.f32 %v398
    %vm405 = vmor %vm403, %vm404
    %v406 = vsel %vm405, %v398, %v402
    %v407 = vand.u32 2147483647, %v383
    %vm408 = vcmp.eq.f32.partialorder %v407, 8.507059e+37
    %v409 = vand.u32 %v383, 2147483648
    %v410 = vor.u32 1.1754944e-38, %v409
    %v411 = vsel %vm408, %v410, %v406
    %v412 = vmul.f32 %v375, %v397
    %v413 = vmul.f32 %v377, %v411
    %414 = vrot.lane.b32.xlu0 %v113, 56
    %v415 = vpop.permute.xlu0 %414
    %v418 = vsel %vm126, %v412, 0
    %420 = vmatpush.msra.mxu0 0.0
    %421 = vmatpush.msra.mxu0 0.0
    %422 = vmatpush.msra.mxu0 0.0
    %423 = vmatpush.msra.mxu0 0.0
    %424 = vmatpush.msra.mxu0 0.0
    %425 = vmatpush.msra.mxu0 0.0
    %426 = vmatpush.msra.mxu0 0.0
    %427 = vmatpush.msra.mxu0 0.0
    %428 = vmatpush.msra.mxu0 0.0
    %429 = vmatpush.msra.mxu0 0.0
    %430 = vmatpush.msra.mxu0 0.0
    %431 = vmatpush.msra.mxu0 0.0
    %432 = vmatpush.msra.mxu0 0.0
    %433 = vmatpush.msra.mxu0 0.0
    %434 = vmatpush.msra.mxu0 0.0
    %435 = vmatpush.msra.mxu0 %v415
    %436 = vmatmul.f32.gmra.mxu0 %v418
    %v437 = vpop.f32.mrf.mxu0
    %v438 = vadd.f32 0.0, %v437
    %439 = vdwg.mxu0
    %440 = vrot.lane.b32.xlu0 %v116, 56
    %v441 = vpop.permute.xlu0 %440
    %v444 = vsel %vm126, %v413, 0
    %446 = vmatpush.msra.mxu0 0.0
    %447 = vmatpush.msra.mxu0 0.0
    %448 = vmatpush.msra.mxu0 0.0
    %449 = vmatpush.msra.mxu0 0.0
    %450 = vmatpush.msra.mxu0 0.0
    %451 = vmatpush.msra.mxu0 0.0
    %452 = vmatpush.msra.mxu0 0.0
    %453 = vmatpush.msra.mxu0 0.0
    %454 = vmatpush.msra.mxu0 0.0
    %455 = vmatpush.msra.mxu0 0.0
    %456 = vmatpush.msra.mxu0 0.0
    %457 = vmatpush.msra.mxu0 0.0
    %458 = vmatpush.msra.mxu0 0.0
    %459 = vmatpush.msra.mxu0 0.0
    %460 = vmatpush.msra.mxu0 0.0
    %461 = vmatpush.msra.mxu0 %v441
    %462 = vmatmul.f32.gmra.mxu0 %v444
    %v463 = vpop.f32.mrf.mxu0
    %v464 = vadd.f32 0.0, %v463
    %465 = vdwg.mxu0
    %v466 = vld [vmem:[#allocation7 + $0x8] sm:$0xff]
    %v468 = vsel %vm126, %v438, 0
    %v471 = vsel %vm126, %v464, 0
    %473 = vmatpush.msra.mxu0 0.0
    %474 = vmatpush.msra.mxu0 0.0
    %475 = vmatpush.msra.mxu0 0.0
    %476 = vmatpush.msra.mxu0 0.0
    %477 = vmatpush.msra.mxu0 0.0
    %478 = vmatpush.msra.mxu0 0.0
    %479 = vmatpush.msra.mxu0 0.0
    %480 = vmatpush.msra.mxu0 0.0
    %481 = vmatpush.msra.mxu0 0.0
    %482 = vmatpush.msra.mxu0 0.0
    %483 = vmatpush.msra.mxu0 0.0
    %484 = vmatpush.msra.mxu0 0.0
    %485 = vmatpush.msra.mxu0 0.0
    %486 = vmatpush.msra.mxu0 0.0
    %487 = vmatpush.msra.mxu0 0.0
    %488 = vmatpush.msra.mxu0 %v466
    %489 = vmatmul.f32.gmra.mxu0 %v468
    %v490 = vpop.f32.mrf.mxu0
    %v491 = vadd.f32 0.0, %v490
    %492 = vmatmul.f32.gmra.mxu0 %v471
    %v493 = vpop.f32.mrf.mxu0
    %v494 = vadd.f32 0.0, %v493
    %495 = vdwg.mxu0
    %v496 = vadd.f32 %v308, %v491
    %v497 = vadd.f32 %v309, %v494
    %498 = vrot.lane.b32.xlu0 %v113, 112
    %v499 = vpop.permute.xlu0 %498
    %500 = vrot.lane.b32.xlu0 %v113, 80
    %v501 = vpop.permute.xlu0 %500
    %v502 = vsel %vm126, %v499, 0
    %v504 = vsel %vm126, %v501, 0
    %506 = vmatpush.xpose.msra.mxu0 0.0
    %507 = vmatpush.xpose.msra.mxu0 0.0
    %508 = vmatpush.xpose.msra.mxu0 0.0
    %509 = vmatpush.xpose.msra.mxu0 0.0
    %510 = vmatpush.xpose.msra.mxu0 0.0
    %511 = vmatpush.xpose.msra.mxu0 0.0
    %512 = vmatpush.xpose.msra.mxu0 0.0
    %513 = vmatpush.xpose.msra.mxu0 0.0
    %514 = vmatpush.xpose.msra.mxu0 0.0
    %515 = vmatpush.xpose.msra.mxu0 0.0
    %516 = vmatpush.xpose.msra.mxu0 0.0
    %517 = vmatpush.xpose.msra.mxu0 0.0
    %518 = vmatpush.xpose.msra.mxu0 0.0
    %519 = vmatpush.xpose.msra.mxu0 0.0
    %520 = vmatpush.xpose.msra.mxu0 0.0
    %521 = vmatpush.xpose.msra.mxu0 %v504
    %522 = vmatmul.f32.gmra.mxu0 %v502
    %v523 = vpop.f32.mrf.mxu0
    %v524 = vadd.f32 %v118, %v523
    %525 = vdwg.mxu0
    %526 = vrot.lane.b32.xlu0 %v116, 112
    %v527 = vpop.permute.xlu0 %526
    %528 = vrot.lane.b32.xlu0 %v116, 80
    %v529 = vpop.permute.xlu0 %528
    %v530 = vsel %vm126, %v527, 0
    %v532 = vsel %vm126, %v529, 0
    %534 = vmatpush.xpose.msra.mxu0 0.0
    %535 = vmatpush.xpose.msra.mxu0 0.0
    %536 = vmatpush.xpose.msra.mxu0 0.0
    %537 = vmatpush.xpose.msra.mxu0 0.0
    %538 = vmatpush.xpose.msra.mxu0 0.0
    %539 = vmatpush.xpose.msra.mxu0 0.0
    %540 = vmatpush.xpose.msra.mxu0 0.0
    %541 = vmatpush.xpose.msra.mxu0 0.0
    %542 = vmatpush.xpose.msra.mxu0 0.0
    %543 = vmatpush.xpose.msra.mxu0 0.0
    %544 = vmatpush.xpose.msra.mxu0 0.0
    %545 = vmatpush.xpose.msra.mxu0 0.0
    %546 = vmatpush.xpose.msra.mxu0 0.0
    %547 = vmatpush.xpose.msra.mxu0 0.0
    %548 = vmatpush.xpose.msra.mxu0 0.0
    %549 = vmatpush.xpose.msra.mxu0 %v532
    %550 = vmatmul.f32.gmra.mxu0 %v530
    %v551 = vpop.f32.mrf.mxu0
    %v552 = vadd.f32 %v118, %v551
    %553 = vdwg.mxu0
    %v554 = vsel %vm126, %v524, -inf
    %555 = vmax.xlane.f32.xlu0 %v554
    %v556 = vpop.xlane.xlu0 %555
    %v557 = vsel %vm126, %v552, -inf
    %558 = vmax.xlane.f32.xlu0 %v557
    %v559 = vpop.xlane.xlu0 %558
    %v560 = vsub.f32 %v524, %v556
    %v561 = vsub.f32 %v552, %v559
    %v562 = vmul.f32 %v560, 1.442695
    %v563 = vpow.pop %v562
    %v564 = vmul.f32 %v561, 1.442695
    %v565 = vpow.pop %v564
    %v566 = vsel %vm126, %v563, 0.0
    %567 = vadd.xlane.f32.xlu0 %v566
    %v568 = vpop.xlane.xlu0 %567
    %v569 = vsel %vm126, %v565, 0.0
    %570 = vadd.xlane.f32.xlu0 %v569
    %v571 = vpop.xlane.xlu0 %570
    %v572 = vrcp.pop %v568
    %v573 = vmul.f32 %v568, %v572
    %v574 = vsub.f32 1.0, %v573
    %v575 = vmul.f32 %v572, %v574
    %v576 = vadd.f32 %v572, %v575
    %vm577 = vweird.f32 %v568
    %vm578 = vweird.f32 %v572
    %vm579 = vmor %vm577, %vm578
    %v580 = vsel %vm579, %v572, %v576
    %v581 = vand.u32 2147483647, %v568
    %vm582 = vcmp.eq.f32.partialorder %v581, 8.507059e+37
    %v583 = vand.u32 %v568, 2147483648
    %v584 = vor.u32 1.1754944e-38, %v583
    %v585 = vsel %vm582, %v584, %v580
    %v586 = vrcp.pop %v571
    %v587 = vmul.f32 %v571, %v586
    %v588 = vsub.f32 1.0, %v587
    %v589 = vmul.f32 %v586, %v588
    %v590 = vadd.f32 %v586, %v589
    %vm591 = vweird.f32 %v571
    %vm592 = vweird.f32 %v586
    %vm593 = vmor %vm591, %vm592
    %v594 = vsel %vm593, %v586, %v590
    %v595 = vand.u32 2147483647, %v571
    %vm596 = vcmp.eq.f32.partialorder %v595, 8.507059e+37
    %v597 = vand.u32 %v571, 2147483648
    %v598 = vor.u32 1.1754944e-38, %v597
    %v599 = vsel %vm596, %v598, %v594
    %v600 = vmul.f32 %v563, %v585
    %v601 = vmul.f32 %v565, %v599
    %602 = vrot.lane.b32.xlu0 %v113, 48
    %v603 = vpop.permute.xlu0 %602
    %v606 = vsel %vm126, %v600, 0
    %608 = vmatpush.msra.mxu0 0.0
    %609 = vmatpush.msra.mxu0 0.0
    %610 = vmatpush.msra.mxu0 0.0
    %611 = vmatpush.msra.mxu0 0.0
    %612 = vmatpush.msra.mxu0 0.0
    %613 = vmatpush.msra.mxu0 0.0
    %614 = vmatpush.msra.mxu0 0.0
    %615 = vmatpush.msra.mxu0 0.0
    %616 = vmatpush.msra.mxu0 0.0
    %617 = vmatpush.msra.mxu0 0.0
    %618 = vmatpush.msra.mxu0 0.0
    %619 = vmatpush.msra.mxu0 0.0
    %620 = vmatpush.msra.mxu0 0.0
    %621 = vmatpush.msra.mxu0 0.0
    %622 = vmatpush.msra.mxu0 0.0
    %623 = vmatpush.msra.mxu0 %v603
    %624 = vmatmul.f32.gmra.mxu0 %v606
    %v625 = vpop.f32.mrf.mxu0
    %v626 = vadd.f32 0.0, %v625
    %627 = vdwg.mxu0
    %628 = vrot.lane.b32.xlu0 %v116, 48
    %v629 = vpop.permute.xlu0 %628
    %v632 = vsel %vm126, %v601, 0
    %634 = vmatpush.msra.mxu0 0.0
    %635 = vmatpush.msra.mxu0 0.0
    %636 = vmatpush.msra.mxu0 0.0
    %637 = vmatpush.msra.mxu0 0.0
    %638 = vmatpush.msra.mxu0 0.0
    %639 = vmatpush.msra.mxu0 0.0
    %640 = vmatpush.msra.mxu0 0.0
    %641 = vmatpush.msra.mxu0 0.0
    %642 = vmatpush.msra.mxu0 0.0
    %643 = vmatpush.msra.mxu0 0.0
    %644 = vmatpush.msra.mxu0 0.0
    %645 = vmatpush.msra.mxu0 0.0
    %646 = vmatpush.msra.mxu0 0.0
    %647 = vmatpush.msra.mxu0 0.0
    %648 = vmatpush.msra.mxu0 0.0
    %649 = vmatpush.msra.mxu0 %v629
    %650 = vmatmul.f32.gmra.mxu0 %v632
    %v651 = vpop.f32.mrf.mxu0
    %v652 = vadd.f32 0.0, %v651
    %653 = vdwg.mxu0
    %v654 = vld [vmem:[#allocation7 + $0x10] sm:$0xff]
    %v656 = vsel %vm126, %v626, 0
    %v659 = vsel %vm126, %v652, 0
    %661 = vmatpush.msra.mxu0 0.0
    %662 = vmatpush.msra.mxu0 0.0
    %663 = vmatpush.msra.mxu0 0.0
    %664 = vmatpush.msra.mxu0 0.0
    %665 = vmatpush.msra.mxu0 0.0
    %666 = vmatpush.msra.mxu0 0.0
    %667 = vmatpush.msra.mxu0 0.0
    %668 = vmatpush.msra.mxu0 0.0
    %669 = vmatpush.msra.mxu0 0.0
    %670 = vmatpush.msra.mxu0 0.0
    %671 = vmatpush.msra.mxu0 0.0
    %672 = vmatpush.msra.mxu0 0.0
    %673 = vmatpush.msra.mxu0 0.0
    %674 = vmatpush.msra.mxu0 0.0
    %675 = vmatpush.msra.mxu0 0.0
    %676 = vmatpush.msra.mxu0 %v654
    %677 = vmatmul.f32.gmra.mxu0 %v656
    %v678 = vpop.f32.mrf.mxu0
    %v679 = vadd.f32 0.0, %v678
    %680 = vmatmul.f32.gmra.mxu0 %v659
    %v681 = vpop.f32.mrf.mxu0
    %v682 = vadd.f32 0.0, %v681
    %683 = vdwg.mxu0
    %v684 = vadd.f32 %v496, %v679
    %v685 = vadd.f32 %v497, %v682
    %686 = vrot.lane.b32.xlu0 %v113, 104
    %v687 = vpop.permute.xlu0 %686
    %688 = vrot.lane.b32.xlu0 %v113, 72
    %v689 = vpop.permute.xlu0 %688
    %v690 = vsel %vm126, %v687, 0
    %v692 = vsel %vm126, %v689, 0
    %694 = vmatpush.xpose.msra.mxu0 0.0
    %695 = vmatpush.xpose.msra.mxu0 0.0
    %696 = vmatpush.xpose.msra.mxu0 0.0
    %697 = vmatpush.xpose.msra.mxu0 0.0
    %698 = vmatpush.xpose.msra.mxu0 0.0
    %699 = vmatpush.xpose.msra.mxu0 0.0
    %700 = vmatpush.xpose.msra.mxu0 0.0
    %701 = vmatpush.xpose.msra.mxu0 0.0
    %702 = vmatpush.xpose.msra.mxu0 0.0
    %703 = vmatpush.xpose.msra.mxu0 0.0
    %704 = vmatpush.xpose.msra.mxu0 0.0
    %705 = vmatpush.xpose.msra.mxu0 0.0
    %706 = vmatpush.xpose.msra.mxu0 0.0
    %707 = vmatpush.xpose.msra.mxu0 0.0
    %708 = vmatpush.xpose.msra.mxu0 0.0
    %709 = vmatpush.xpose.msra.mxu0 %v692
    %710 = vmatmul.f32.gmra.mxu0 %v690
    %v711 = vpop.f32.mrf.mxu0
    %v712 = vadd.f32 %v118, %v711
    %713 = vdwg.mxu0
    %714 = vrot.lane.b32.xlu0 %v116, 104
    %v715 = vpop.permute.xlu0 %714
    %716 = vrot.lane.b32.xlu0 %v116, 72
    %v717 = vpop.permute.xlu0 %716
    %v718 = vsel %vm126, %v715, 0
    %v720 = vsel %vm126, %v717, 0
    %722 = vmatpush.xpose.msra.mxu0 0.0
    %723 = vmatpush.xpose.msra.mxu0 0.0
    %724 = vmatpush.xpose.msra.mxu0 0.0
    %725 = vmatpush.xpose.msra.mxu0 0.0
    %726 = vmatpush.xpose.msra.mxu0 0.0
    %727 = vmatpush.xpose.msra.mxu0 0.0
    %728 = vmatpush.xpose.msra.mxu0 0.0
    %729 = vmatpush.xpose.msra.mxu0 0.0
    %730 = vmatpush.xpose.msra.mxu0 0.0
    %731 = vmatpush.xpose.msra.mxu0 0.0
    %732 = vmatpush.xpose.msra.mxu0 0.0
    %733 = vmatpush.xpose.msra.mxu0 0.0
    %734 = vmatpush.xpose.msra.mxu0 0.0
    %735 = vmatpush.xpose.msra.mxu0 0.0
    %736 = vmatpush.xpose.msra.mxu0 0.0
    %737 = vmatpush.xpose.msra.mxu0 %v720
    %738 = vmatmul.f32.gmra.mxu0 %v718
    %v739 = vpop.f32.mrf.mxu0
    %v740 = vadd.f32 %v118, %v739
    %741 = vdwg.mxu0
    %v742 = vsel %vm126, %v712, -inf
    %743 = vmax.xlane.f32.xlu0 %v742
    %v744 = vpop.xlane.xlu0 %743
    %v745 = vsel %vm126, %v740, -inf
    %746 = vmax.xlane.f32.xlu0 %v745
    %v747 = vpop.xlane.xlu0 %746
    %v748 = vsub.f32 %v712, %v744
    %v749 = vsub.f32 %v740, %v747
    %v750 = vmul.f32 %v748, 1.442695
    %v751 = vpow.pop %v750
    %v752 = vmul.f32 %v749, 1.442695
    %v753 = vpow.pop %v752
    %v754 = vsel %vm126, %v751, 0.0
    %755 = vadd.xlane.f32.xlu0 %v754
    %v756 = vpop.xlane.xlu0 %755
    %v757 = vsel %vm126, %v753, 0.0
    %758 = vadd.xlane.f32.xlu0 %v757
    %v759 = vpop.xlane.xlu0 %758
    %v760 = vrcp.pop %v756
    %v761 = vmul.f32 %v756, %v760
    %v762 = vsub.f32 1.0, %v761
    %v763 = vmul.f32 %v760, %v762
    %v764 = vadd.f32 %v760, %v763
    %vm765 = vweird.f32 %v756
    %vm766 = vweird.f32 %v760
    %vm767 = vmor %vm765, %vm766
    %v768 = vsel %vm767, %v760, %v764
    %v769 = vand.u32 2147483647, %v756
    %vm770 = vcmp.eq.f32.partialorder %v769, 8.507059e+37
    %v771 = vand.u32 %v756, 2147483648
    %v772 = vor.u32 1.1754944e-38, %v771
    %v773 = vsel %vm770, %v772, %v768
    %v774 = vrcp.pop %v759
    %v775 = vmul.f32 %v759, %v774
    %v776 = vsub.f32 1.0, %v775
    %v777 = vmul.f32 %v774, %v776
    %v778 = vadd.f32 %v774, %v777
    %vm779 = vweird.f32 %v759
    %vm780 = vweird.f32 %v774
    %vm781 = vmor %vm779, %vm780
    %v782 = vsel %vm781, %v774, %v778
    %v783 = vand.u32 2147483647, %v759
    %vm784 = vcmp.eq.f32.partialorder %v783, 8.507059e+37
    %v785 = vand.u32 %v759, 2147483648
    %v786 = vor.u32 1.1754944e-38, %v785
    %v787 = vsel %vm784, %v786, %v782
    %v788 = vmul.f32 %v751, %v773
    %v789 = vmul.f32 %v753, %v787
    %790 = vrot.lane.b32.xlu0 %v113, 40
    %v791 = vpop.permute.xlu0 %790
    %v794 = vsel %vm126, %v788, 0
    %796 = vmatpush.msra.mxu0 0.0
    %797 = vmatpush.msra.mxu0 0.0
    %798 = vmatpush.msra.mxu0 0.0
    %799 = vmatpush.msra.mxu0 0.0
    %800 = vmatpush.msra.mxu0 0.0
    %801 = vmatpush.msra.mxu0 0.0
    %802 = vmatpush.msra.mxu0 0.0
    %803 = vmatpush.msra.mxu0 0.0
    %804 = vmatpush.msra.mxu0 0.0
    %805 = vmatpush.msra.mxu0 0.0
    %806 = vmatpush.msra.mxu0 0.0
    %807 = vmatpush.msra.mxu0 0.0
    %808 = vmatpush.msra.mxu0 0.0
    %809 = vmatpush.msra.mxu0 0.0
    %810 = vmatpush.msra.mxu0 0.0
    %811 = vmatpush.msra.mxu0 %v791
    %812 = vmatmul.f32.gmra.mxu0 %v794
    %v813 = vpop.f32.mrf.mxu0
    %v814 = vadd.f32 0.0, %v813
    %815 = vdwg.mxu0
    %816 = vrot.lane.b32.xlu0 %v116, 40
    %v817 = vpop.permute.xlu0 %816
    %v820 = vsel %vm126, %v789, 0
    %822 = vmatpush.msra.mxu0 0.0
    %823 = vmatpush.msra.mxu0 0.0
    %824 = vmatpush.msra.mxu0 0.0
    %825 = vmatpush.msra.mxu0 0.0
    %826 = vmatpush.msra.mxu0 0.0
    %827 = vmatpush.msra.mxu0 0.0
    %828 = vmatpush.msra.mxu0 0.0
    %829 = vmatpush.msra.mxu0 0.0
    %830 = vmatpush.msra.mxu0 0.0
    %831 = vmatpush.msra.mxu0 0.0
    %832 = vmatpush.msra.mxu0 0.0
    %833 = vmatpush.msra.mxu0 0.0
    %834 = vmatpush.msra.mxu0 0.0
    %835 = vmatpush.msra.mxu0 0.0
    %836 = vmatpush.msra.mxu0 0.0
    %837 = vmatpush.msra.mxu0 %v817
    %838 = vmatmul.f32.gmra.mxu0 %v820
    %v839 = vpop.f32.mrf.mxu0
    %v840 = vadd.f32 0.0, %v839
    %841 = vdwg.mxu0
    %v842 = vld [vmem:[#allocation7 + $0x18] sm:$0xff]
    %v844 = vsel %vm126, %v814, 0
    %v847 = vsel %vm126, %v840, 0
    %849 = vmatpush.msra.mxu0 0.0
    %850 = vmatpush.msra.mxu0 0.0
    %851 = vmatpush.msra.mxu0 0.0
    %852 = vmatpush.msra.mxu0 0.0
    %853 = vmatpush.msra.mxu0 0.0
    %854 = vmatpush.msra.mxu0 0.0
    %855 = vmatpush.msra.mxu0 0.0
    %856 = vmatpush.msra.mxu0 0.0
    %857 = vmatpush.msra.mxu0 0.0
    %858 = vmatpush.msra.mxu0 0.0
    %859 = vmatpush.msra.mxu0 0.0
    %860 = vmatpush.msra.mxu0 0.0
    %861 = vmatpush.msra.mxu0 0.0
    %862 = vmatpush.msra.mxu0 0.0
    %863 = vmatpush.msra.mxu0 0.0
    %864 = vmatpush.msra.mxu0 %v842
    %865 = vmatmul.f32.gmra.mxu0 %v844
    %v866 = vpop.f32.mrf.mxu0
    %v867 = vadd.f32 0.0, %v866
    %868 = vmatmul.f32.gmra.mxu0 %v847
    %v869 = vpop.f32.mrf.mxu0
    %v870 = vadd.f32 0.0, %v869
    %871 = vdwg.mxu0
    %v872 = vadd.f32 %v684, %v867
    %v873 = vadd.f32 %v685, %v870
    %874 = vst.msk [vmem:[#allocation10] sm:$0xff] %vm88, %v872
    %875 = vst.msk [vmem:[#allocation10 + $0x8] sm:$0xff] %vm88, %v873
    // Predicated region
    $region38: #{tpu_custom_call.1} parent=1 // pred_check
      _
    $region39: #{tpu_custom_call.1} parent=1 // pred_check_branch
      %877 = sbr.rel (0) target = $region41
    $region40: #{tpu_custom_call.1} parent=1 // pred_region
      %879 = vsyncadd [#allocation4], 0
      %s880 = sshll.u32 [#allocation10], 4
      %s881 = int_to_ptr.vmem [resolvable:$true] %s880
      %s882 = sshll.u32 %s5, 4
      %s883 = int_to_ptr.hbm [resolvable:$true] %s882
      %888 = dma.vmem_to_hbm [thread:$0]  %s881, 256, %s883, [#allocation4], 128, 128, 8
    $region41: #{tpu_custom_call.1} parent=1 // pred_fallthru
      _
    // Predicated region
    $region42: #{tpu_custom_call.1} parent=1 // pred_check
      _
    $region43: #{tpu_custom_call.1} parent=1 // pred_check_branch
      %890 = sbr.rel (0) target = $region45
    $region44: #{tpu_custom_call.1} parent=1 // pred_region
      %892 = dma.done [#allocation4], 256
    $region45: #{tpu_custom_call.1} parent=1 // pred_fallthru
      _
    %893 = vsyncpa [#allocation3], 1
    %894 = vsyncpa [#allocation6], 1
    %895 = vsyncpa [#allocation9], 1
    %896 = vsyncpa [#allocation4], 1

</llo_original>
